<compile_context>
chip_gen: v7x
topology: tpu7x:2x2x1
jax: 0.10.0
libtpu: 0.0.40
codegen_flags: <defaults>
</compile_context>

<pallas_src>
import functools

import jax
import jax.numpy as jnp
import numpy as np
from jax.experimental import pallas as pl
from jax.experimental.pallas import tpu as pltpu

N_FEATS = 6                 # must be divisible by 3 (module assumption)
H = 16
W = 16
EPS = 1e-6

# (k1, k2, dilation2) for the LKA3/X3, LKA5/X5, LKA7/X7 branches
BRANCHES = ((3, 5, 2), (5, 7, 3), (7, 9, 4))
KK1_MAX = max(k1 * k1 for k1, _, _ in BRANCHES)   # 49
KK2_MAX = max(k2 * k2 for _, k2, _ in BRANCHES)   # 81


# ----------------------------------------------------------------------------
# pltpu.roll shift-convention resolution.  Kept as a one-time cached micro
# probe (tiny pallas_call) rather than a hardcode: zero steady-state cost and
# it keeps the dwconv shift math correct regardless of the sign convention.
# ----------------------------------------------------------------------------
_ROLL_LIKE_JNP = None


def _roll_matches_jnp():
    global _ROLL_LIKE_JNP
    if _ROLL_LIKE_JNP is None:
        def probe(x_ref, o_ref):
            o_ref[...] = pltpu.roll(x_ref[...], 1, axis=1)

        x = jnp.arange(256, dtype=jnp.float32).reshape(1, 256)
        y = pl.pallas_call(
            probe, out_shape=jax.ShapeDtypeStruct((1, 256), jnp.float32))(x)
        first = float(y[0, 0])
        assert first in (255.0, 1.0), f"unexpected roll convention probe {first}"
        _ROLL_LIKE_JNP = (first == 255.0)     # jnp.roll(x, 1)[0] == x[-1]
    return _ROLL_LIKE_JNP


# ----------------------------------------------------------------------------
# Pallas kernel: full MLKA forward for a (C, BT, HW) batch tile.
# ----------------------------------------------------------------------------
def _mlka_kernel(x_ref, ln_ref, mixa_ref, mixx_ref, mixo_ref,
                 dw1_ref, dw2_ref, pw_ref, o_ref,
                 *, n_feats, gc, img_h, img_w, roll_like_jnp):
    C, GC, HH, WW = n_feats, gc, img_h, img_w
    HW = HH * WW
    f32 = jnp.float32

    # -------- grid-step invariant setup -------------------------------------
    lnv = ln_ref[...]                                # (C, 3)
    ln_w = lnv[:, 0][:, None, None]
    ln_b = lnv[:, 1][:, None, None]
    scale = lnv[:, 2][:, None, None]
    mixa = mixa_ref[...]                             # (2C, C+1)  duplicated a-half
    mixx = mixx_ref[...]                             # (C,  C+1)  x-half of proj_first
    mixo = mixo_ref[...]                             # (C,  C+1)  proj_last
    dw1v = dw1_ref[...]                              # (3*2GC, KK1_MAX+1)
    dw2v = dw2_ref[...]                              # (3*GC,  KK2_MAX+1)
    pwv = pw_ref[...]                                # (3*GC,  GC+1)

    # Flat-position iotas for the depthwise edge masks (per-image: HW is its
    # own trailing axis, so lane rolls never cross image boundaries).
    pos = jax.lax.broadcasted_iota(jnp.int32, (1, 1, HW), 2)
    if WW & (WW - 1) == 0:
        w_idx = jnp.bitwise_and(pos, WW - 1)
    else:
        w_idx = jax.lax.rem(pos, WW)

    # Edge masks built once per unique (dy, dx) and reused across all taps,
    # branches and both dwconv passes (JAX does not CSE these).
    ymask_cache, xmask_cache, mask_cache = {}, {}, {}

    def get_mask(dy, dx):
        key = (dy, dx)
        if key not in mask_cache:
            ym = ymask_cache.get(dy)
            if ym is None and dy != 0:
                ym = (pos < (HH - dy) * WW) if dy > 0 else (pos >= (-dy) * WW)
                ymask_cache[dy] = ym
            xm = xmask_cache.get(dx)
            if xm is None and dx != 0:
                xm = (w_idx < (WW - dx)) if dx > 0 else (w_idx >= (-dx))
                xmask_cache[dx] = xm
            if ym is None:
                mask_cache[key] = xm
            elif xm is None:
                mask_cache[key] = ym
            else:
                mask_cache[key] = jnp.logical_and(ym, xm)
        return mask_cache[key]

    def mixmul(wmat, bias, x):
        """1x1 conv (VPU FMAs, no MXU): wmat (R, Cin), bias (R, 1),
        x (Cin, BT, HW) -> (R, BT, HW)."""
        acc0, acc1 = None, None
        for ci in range(x.shape[0]):
            term = wmat[:, ci][:, None, None] * x[ci:ci + 1]
            if ci & 1:
                acc1 = term if acc1 is None else acc1 + term
            else:
                acc0 = term if acc0 is None else acc0 + term
        acc = acc0 if acc1 is None else acc0 + acc1
        return acc + bias[:, :, None]

    def dwconv(val, wts, bias, k, d):
        """Depthwise conv, stride 1, zero 'same' padding, dilation d.

        val: (R, BT, HW); wts: (R, k*k); bias: (R, 1).
        Shifts = lane rotations of register-resident data; out-of-image source
        pixels are zeroed with a cached mask.  Taps that only ever see padding
        (|offset| >= H or W) are skipped at trace time.  Two accumulator
        chains keep the VALU slots full.
        """
        ctr = k // 2
        offs = [(i - ctr) * d for i in range(k)]
        accs = [None, None]
        n = 0
        for iy, dy in enumerate(offs):
            if dy <= -HH or dy >= HH:
                continue
            for ix, dx in enumerate(offs):
                if dx <= -WW or dx >= WW:
                    continue
                t = iy * k + ix
                src_off = dy * WW + dx               # result[p] = val[p + src_off]
                if src_off == 0:
                    rolled = val
                else:
                    amt = (-src_off) % HW if roll_like_jnp else src_off % HW
                    rolled = pltpu.roll(val, amt, axis=2)
                mask = get_mask(dy, dx)
                if mask is not None:
                    rolled = jnp.where(mask, rolled, 0.0)
                term = rolled * wts[:, t][:, None, None]
                slot = n & 1
                accs[slot] = term if accs[slot] is None else accs[slot] + term
                n += 1
        acc = accs[0] if accs[1] is None else accs[0] + accs[1]
        return acc + bias[:, :, None]

    # -------- whole-block compute (no per-image loop) ------------------------
    xv = x_ref[...].astype(f32)                      # (C, BT, HW)

    # LayerNorm over channels (channels_first manual path, biased variance).
    u = jnp.sum(xv, axis=0, keepdims=True) * (1.0 / C)
    xc = xv - u
    var = jnp.sum(xc * xc, axis=0, keepdims=True) * (1.0 / C)
    xn = xc * jax.lax.rsqrt(var + EPS)
    xn = xn * ln_w + ln_b

    # proj_first: a-half duplicated per branch ([a_i; a_i] blocks), x-half.
    st_all = mixmul(mixa[:, 0:C], mixa[:, C:C + 1], xn)   # (3*2GC, BT, HW)
    xg = mixmul(mixx[:, 0:C], mixx[:, C:C + 1], xn)       # (C, BT, HW)

    # proj_last accumulated branch by branch (no concatenation needed).
    out = mixo[:, C:C + 1][:, :, None]                    # (C, 1, 1) bias
    for i, (k1, k2, d2) in enumerate(BRANCHES):
        r1 = 2 * GC * i
        r2 = GC * i
        st = st_all[r1:r1 + 2 * GC]                       # [a_i ; a_i]
        # shared pass: LKA first dw conv + X dw conv (same shifts & masks)
        y = dwconv(st,
                   dw1v[r1:r1 + 2 * GC, 0:k1 * k1],
                   dw1v[r1:r1 + 2 * GC, KK1_MAX:KK1_MAX + 1],
                   k1, 1)
        t1 = y[0:GC]
        xx = y[GC:2 * GC]
        t2 = dwconv(t1,
                    dw2v[r2:r2 + GC, 0:k2 * k2],
                    dw2v[r2:r2 + GC, KK2_MAX:KK2_MAX + 1],
                    k2, d2)
        lk = mixmul(pwv[r2:r2 + GC, 0:GC],
                    pwv[r2:r2 + GC, GC:GC + 1], t2)       # grouped 1x1
        zi = xg[r2:r2 + GC] * (lk * xx)                   # x * (LKA * X)
        for cl in range(GC):                              # proj_last FMAs
            col = r2 + cl
            out = out + mixo[:, col][:, None, None] * zi[cl:cl + 1]

    o_ref[...] = (out * scale + xv).astype(o_ref.dtype)


# ----------------------------------------------------------------------------
# Parameters (deterministic, torch-shaped) + packing into 7 kernel arrays.
# ----------------------------------------------------------------------------
PARAM_KEYS = [
    'ln_w', 'ln_b', 'pf_w', 'pf_b',
    'l3w1', 'l3b1', 'l3w2', 'l3b2', 'l3wp', 'l3bp',
    'l5w1', 'l5b1', 'l5w2', 'l5b2', 'l5wp', 'l5bp',
    'l7w1', 'l7b1', 'l7w2', 'l7b2', 'l7wp', 'l7bp',
    'x3w', 'x3b', 'x5w', 'x5b', 'x7w', 'x7b',
    'plw', 'plb', 'scale',
]


def make_params(key, n_feats=N_FEATS):
    gc = n_feats // 3
    shapes = {
        'ln_w': (n_feats,), 'ln_b': (n_feats,),
        'pf_w': (2 * n_feats, n_feats, 1, 1), 'pf_b': (2 * n_feats,),
        'l3w1': (gc, 1, 3, 3), 'l3b1': (gc,),
        'l3w2': (gc, 1, 5, 5), 'l3b2': (gc,),
        'l3wp': (gc, gc, 1, 1), 'l3bp': (gc,),
        'l5w1': (gc, 1, 5, 5), 'l5b1': (gc,),
        'l5w2': (gc, 1, 7, 7), 'l5b2': (gc,),
        'l5wp': (gc, gc, 1, 1), 'l5bp': (gc,),
        'l7w1': (gc, 1, 7, 7), 'l7b1': (gc,),
        'l7w2': (gc, 1, 9, 9), 'l7b2': (gc,),
        'l7wp': (gc, gc, 1, 1), 'l7bp': (gc,),
        'x3w': (gc, 1, 3, 3), 'x3b': (gc,),
        'x5w': (gc, 1, 5, 5), 'x5b': (gc,),
        'x7w': (gc, 1, 7, 7), 'x7b': (gc,),
        'plw': (n_feats, n_feats, 1, 1), 'plb': (n_feats,),
        'scale': (1, n_feats, 1, 1),
    }
    params = {}
    keys = jax.random.split(key, len(PARAM_KEYS))
    for name, kk in zip(PARAM_KEYS, keys):
        # torch inits scale=0 / ln_w=1 / ln_b=0; use small random values so the
        # whole datapath is exercised.
        params[name] = 0.1 * jax.random.normal(kk, shapes[name], jnp.float32)
    params['ln_w'] = params['ln_w'] + 1.0
    return params


def pack_params(P, n_feats=N_FEATS):
    """Pack the 31 torch-shaped params into 7 kernel-layout arrays."""
    C = n_feats
    gc = C // 3
    f32 = jnp.float32

    ln_scale = jnp.stack(
        [P['ln_w'], P['ln_b'], P['scale'].reshape(-1)], axis=1).astype(f32)  # (C,3)

    pf_w = P['pf_w'][:, :, 0, 0]        # (2C, C) output-major
    pf_b = P['pf_b']
    pl_w = P['plw'][:, :, 0, 0]         # (C, C)
    pl_b = P['plb']

    # duplicated a-half: branch i rows = [W_ai ; W_ai] (shared conv1/X pass)
    a_blocks, a_bias = [], []
    for i in range(3):
        wa = pf_w[i * gc:(i + 1) * gc, :]
        ba = pf_b[i * gc:(i + 1) * gc]
        a_blocks += [wa, wa]
        a_bias += [ba, ba]
    mix_a = jnp.concatenate(
        [jnp.concatenate(a_blocks, axis=0),
         jnp.concatenate(a_bias, axis=0)[:, None]], axis=1).astype(f32)      # (2C,C+1)
    mix_x = jnp.concatenate(
        [pf_w[C:2 * C, :], pf_b[C:2 * C, None]], axis=1).astype(f32)         # (C,C+1)
    mix_o = jnp.concatenate([pl_w, pl_b[:, None]], axis=1).astype(f32)       # (C,C+1)

    def dwflat(w):                      # (gc, 1, k, k) -> (gc, k*k)
        return w.reshape(gc, -1)

    dw1_rows, b1_rows, dw2_rows, b2_rows, pw_rows = [], [], [], [], []
    for (k1, k2, _), pre in zip(BRANCHES, ('l3', 'l5', 'l7')):
        xw, xb = f"x{pre[1]}w", f"x{pre[1]}b"
        blk1 = jnp.zeros((2 * gc, KK1_MAX), f32)
        blk1 = blk1.at[0:gc, 0:k1 * k1].set(dwflat(P[pre + 'w1']))
        blk1 = blk1.at[gc:2 * gc, 0:k1 * k1].set(dwflat(P[xw]))
        dw1_rows.append(blk1)
        b1_rows.append(jnp.concatenate([P[pre + 'b1'], P[xb]])[:, None])

        blk2 = jnp.zeros((gc, KK2_MAX), f32)
        blk2 = blk2.at[:, 0:k2 * k2].set(dwflat(P[pre + 'w2']))
        dw2_rows.append(blk2)
        b2_rows.append(P[pre + 'b2'][:, None])

        pw_rows.append(jnp.concatenate(
            [P[pre + 'wp'][:, :, 0, 0], P[pre + 'bp'][:, None]], axis=1))

    dw1 = jnp.concatenate(
        [jnp.concatenate(dw1_rows, 0), jnp.concatenate(b1_rows, 0)], axis=1)  # (3*2gc, 50)
    dw2 = jnp.concatenate(
        [jnp.concatenate(dw2_rows, 0), jnp.concatenate(b2_rows, 0)], axis=1)  # (3*gc, 82)
    pw = jnp.concatenate(pw_rows, axis=0).astype(f32)                         # (3*gc, gc+1)

    return [ln_scale, mix_a, mix_x, mix_o,
            dw1.astype(f32), dw2.astype(f32), pw]


# ----------------------------------------------------------------------------
# Wrapper: NCHW in / NCHW out, (C, B, HW) internal layout, grid over batch.
# ----------------------------------------------------------------------------
def _pick_batch_tile(padded_b):
    """padded_b is a multiple of 8.  Pick the largest multiple-of-8 tile
    (<= 64 images ~= 384 KiB/block) that divides padded_b; prefer >= 2
    parallel grid steps when the batch is big enough (v7x megacore)."""
    cap = 64
    best = 8
    for bt in range(8, min(cap, padded_b) + 1, 8):
        if padded_b % bt == 0:
            best = bt
    if padded_b // best == 1 and padded_b >= 16:
        half = padded_b // 2
        if half % 8 == 0:
            best = half
    return best


def mlka_pallas(x_nchw, packed):
    B, C, h, w = x_nchw.shape
    assert C % 3 == 0
    HW = h * w
    gc = C // 3

    # pad batch to a multiple of 8 so the (C, BT, HW) block is fully
    # (8,128)-tiled (dense DMA in, one unmasked store out)
    Bp = ((B + 7) // 8) * 8
    BT = _pick_batch_tile(Bp)
    assert Bp % BT == 0

    # layout: channels leading, batch on sublanes, flattened spatial on lanes
    xf = jnp.transpose(x_nchw.reshape(B, C, HW), (1, 0, 2)).astype(jnp.float32)
    if Bp != B:
        xf = jnp.pad(xf, ((0, 0), (0, Bp - B), (0, 0)))

    in_specs = [pl.BlockSpec((C, BT, HW), lambda i: (0, i, 0))]
    for p in packed:
        in_specs.append(pl.BlockSpec(p.shape, lambda i: (0, 0)))   # resident params

    kern = functools.partial(
        _mlka_kernel, n_feats=C, gc=gc, img_h=h, img_w=w,
        roll_like_jnp=_roll_matches_jnp())

    out = pl.pallas_call(
        kern,
        out_shape=jax.ShapeDtypeStruct((C, Bp, HW), jnp.float32),
        grid_spec=pltpu.PrefetchScalarGridSpec(
            num_scalar_prefetch=0,
            grid=(Bp // BT,),
            in_specs=in_specs,
            out_specs=pl.BlockSpec((C, BT, HW), lambda i: (0, i, 0)),
        ),
        compiler_params=pltpu.CompilerParams(
            dimension_semantics=("parallel",)),
    )(xf, *packed)

    out = out[:, :B, :]
    return jnp.transpose(out, (1, 0, 2)).reshape(B, C, h, w)


# ----------------------------------------------------------------------------
# Pure-JAX reference (mirrors the PyTorch forward, NCHW) for validation.
# ----------------------------------------------------------------------------
def ref_forward(x, P):
    shortcut = x
    u = jnp.mean(x, axis=1, keepdims=True)
    s = jnp.mean((x - u) ** 2, axis=1, keepdims=True)
    xn = (x - u) / jnp.sqrt(s + EPS)
    xn = P['ln_w'][None, :, None, None] * xn + P['ln_b'][None, :, None, None]

    def conv1x1(v, w, b):
        return (jnp.einsum('bchw,oc->bohw', v, w[:, :, 0, 0])
                + b[None, :, None, None])

    def dw(v, w, b, d):
        k = w.shape[-1]
        pad = (k // 2) * d
        y = jax.lax.conv_general_dilated(
            v, w, window_strides=(1, 1),
            padding=[(pad, pad), (pad, pad)],
            rhs_dilation=(d, d),
            dimension_numbers=('NCHW', 'OIHW', 'NCHW'),
            feature_group_count=w.shape[0])
        return y + b[None, :, None, None]

    y = conv1x1(xn, P['pf_w'], P['pf_b'])
    a, xg = jnp.split(y, 2, axis=1)
    a1, a2, a3 = jnp.split(a, 3, axis=1)

    def branch(ag, w1, b1, w2, b2, wp, bp, xw, xb, d2):
        lk = dw(ag, w1, b1, 1)
        lk = dw(lk, w2, b2, d2)
        lk = conv1x1(lk, wp, bp)
        return lk * dw(ag, xw, xb, 1)

    g1 = branch(a1, P['l3w1'], P['l3b1'], P['l3w2'], P['l3b2'],
                P['l3wp'], P['l3bp'], P['x3w'], P['x3b'], 2)
    g2 = branch(a2, P['l5w1'], P['l5b1'], P['l5w2'], P['l5b2'],
                P['l5wp'], P['l5bp'], P['x5w'], P['x5b'], 3)
    g3 = branch(a3, P['l7w1'], P['l7b1'], P['l7w2'], P['l7b2'],
                P['l7wp'], P['l7bp'], P['x7w'], P['x7b'], 4)
    agg = jnp.concatenate([g1, g2, g3], axis=1)
    return conv1x1(xg * agg, P['plw'], P['plb']) * P['scale'] + shortcut


if __name__ == "__main__":
    key = jax.random.PRNGKey(0)
    kx, kp = jax.random.split(key)
    x = jax.random.normal(kx, (2, N_FEATS, H, W), jnp.float32)   # NCHW input
    P = make_params(kp)
    packed = pack_params(P)

    out = mlka_pallas(x, packed)
    out = jax.block_until_ready(out)

    ref = ref_forward(x, P)
    err = float(jnp.max(jnp.abs(out - ref)))
    assert out.shape == x.shape
    assert np.isfinite(err) and err < 1e-3, f"max abs err {err}"
    print("KERNEL_OK")
</pallas_src>

<mosaic_0001>
module attributes {stable_mosaic.version = 11 : i64} {
  func.func @probe(%arg0: memref<1x256xf32, #tpu.memory_space<vmem>>, %arg1: memref<1x256xf32, #tpu.memory_space<vmem>>) attributes {dimension_semantics = [], scalar_prefetch = 0 : i64, scratch_operands = 0 : i64, tpu.core_type = #tpu.core_type<tc>} {
    %c0 = arith.constant 0 : index
    %c0_0 = arith.constant 0 : index
    %0 = vector.load %arg0[%c0, %c0_0] : memref<1x256xf32, #tpu.memory_space<vmem>>, vector<1x256xf32>
    %c1_i32 = arith.constant 1 : i32
    %1 = tpu.dynamic_rotate %0 by %c1_i32 dim 1 : vector<1x256xf32>, i32 -> vector<1x256xf32>
    %c0_1 = arith.constant 0 : index
    %c0_2 = arith.constant 0 : index
    %2 = vector.load %arg1[%c0_1, %c0_2] : memref<1x256xf32, #tpu.memory_space<vmem>>, vector<1x256xf32>
    tpu.vector_store %arg1[%c0_1, %c0_2], %1 {strides = array<i32>} : memref<1x256xf32, #tpu.memory_space<vmem>>, vector<1x256xf32>,
    return
  }
}

</mosaic_0001>

<llo_original>
// kernel: tpu_custom_call.1
$region0: #{tpu_custom_call.1}
  #allocation0 [shape = 'u32[]', space=smem, size = 0x4, offset = 0x4, fixed_abs, tag = 'smem constant byte address 0x4 - core index']
  #allocation1 [shape = 'u32[144,128]{1,0:T(1,128)}', space=vmem, size = 0x12000, scoped, tag = 'internal scratch']
  %s0 = inlined_call_operand.hbm [shape: f32[1,256], index: 0, kind: input, shape index: {}]
  %s1 = inlined_call_operand.hbm [shape: f32[1,256], index: 1, kind: output, shape index: {}]
  %s2 = sld [smem:[#allocation0]]
  $region18: #{tpu_custom_call.1} parent=0
    _
  %s4 = ssub.s32 1, %s2
  %s5 = scalar_select 0, %s4, %s2
  $region1: #{tpu_custom_call.1} parent=0
    #allocation2 [shape = 'u8[1024]{0}', space=vmem, size = 0x400, scoped, tag = 'input window, operand 0, single buffered']
    #allocation3 [shape = 's32[1]{0}', space=sflag, size = 0x4, scoped, tag = 'scoped memory for tpu_custom_call.1']
    #allocation4 [shape = 's32[1]{0}', space=sflag, size = 0x4, scoped, tag = 'scoped memory for tpu_custom_call.1']
    #allocation5 [shape = 'u8[1024]{0}', space=vmem, size = 0x400, scoped, tag = 'output window, operand 0, single buffered']
    %6 = vsyncpa [#allocation3], 0
    %7 = vsyncpa [#allocation4], 0
    // Predicated region
    $region2: #{tpu_custom_call.1} parent=1 // pred_check
      _
    $region3: #{tpu_custom_call.1} parent=1 // pred_check_branch
      %9 = sbr.rel (0) target = $region5
    $region4: #{tpu_custom_call.1} parent=1 // pred_region
      %s11 = ssub.s32 32, 32
      %12 = vsyncadd [#allocation3], %s11
      %s14 = sshll.u32 [#allocation2], 4
      %s15 = int_to_ptr.vmem [resolvable:$true] %s14
      %17 = dma.hbm_to_vmem [thread:$0]  %s0, 32, %s15, [#allocation3]
    $region5: #{tpu_custom_call.1} parent=1 // pred_fallthru
      _
    // Predicated region
    $region6: #{tpu_custom_call.1} parent=1 // pred_check
      _
    $region7: #{tpu_custom_call.1} parent=1 // pred_check_branch
      %19 = sbr.rel (0) target = $region9
    $region8: #{tpu_custom_call.1} parent=1 // pred_region
      %20 = dma.done [#allocation3], 32
    $region9: #{tpu_custom_call.1} parent=1 // pred_fallthru
      _
    %v21 = vld [vmem:[#allocation2] sm:$0x3]
    %v23 = vlaneseq
    %v24 = vshrl.u32 %v23, 7
    %v25 = vsub.s32 0, %v24
    %v26 = vrot.slane %v21, %v25
    %v27 = vlaneseq
    %v28 = vshrl.u32 %v27, 7
    %v29 = vsub.s32 1, %v28
    %v30 = vrot.slane %v21, %v29
    %33 = vrot.lane.b32.xlu0 %v26, 1
    %v34 = vpop.permute.xlu0 %33
    %35 = vrot.lane.b32.xlu0 %v30, 1
    %v36 = vpop.permute.xlu0 %35
    %v37 = vlaneseq
    %v38 = vand.u32 %v37, 127
    %vm39 = vcmp.lt.s32.totalorder %v38, 1
    %v40 = vsel %vm39, %v34, %v36
    %v41 = vsel %vm39, %v36, %v34
    %v44 = vcombine.low %v41, %v40
    %v46 = vunpack.c.l.s4 1966171168
    %v47 = vunpack.c.0.s8 %v46
    %v48 = vlaneseq
    %v49 = vshrl.u32 %v48, 7
    %v50 = vsub.s32 %v47, %v49
    %v51 = vrot.slane %v44, %v50
    %v53 = vunpack.c.l.s4 1966171168
    %v54 = vunpack.c.0.s8 %v53
    %v55 = vlaneseq
    %v56 = vshrl.u32 %v55, 7
    %v57 = vsub.s32 %v54, %v56
    %v58 = vrot.slane %v51, %v57
    %v60 = vlaneseq
    %vm61 = vcmp.ge.s32.totalorder %v60, 0
    %vm62 = vcmp.lt.s32.totalorder %v60, 256
    %vm63 = vmand %vm61, %vm62
    %64 = vst.msk [vmem:[#allocation5] sm:$0x3] %vm63, %v58
    // Predicated region
    $region10: #{tpu_custom_call.1} parent=1 // pred_check
      _
    $region11: #{tpu_custom_call.1} parent=1 // pred_check_branch
      %66 = sbr.rel (0) target = $region13
    $region12: #{tpu_custom_call.1} parent=1 // pred_region
      %s68 = ssub.s32 32, 32
      %69 = vsyncadd [#allocation4], %s68
      %s71 = sshll.u32 [#allocation5], 4
      %s72 = int_to_ptr.vmem [resolvable:$true] %s71
      %74 = dma.vmem_to_hbm [thread:$0]  %s72, 32, %s1, [#allocation4]
    $region13: #{tpu_custom_call.1} parent=1 // pred_fallthru
      _
    // Predicated region
    $region14: #{tpu_custom_call.1} parent=1 // pred_check
      _
    $region15: #{tpu_custom_call.1} parent=1 // pred_check_branch
      %76 = sbr.rel (0) target = $region17
    $region16: #{tpu_custom_call.1} parent=1 // pred_region
      %77 = dma.done [#allocation4], 32
    $region17: #{tpu_custom_call.1} parent=1 // pred_fallthru
      _
    %78 = vsyncpa [#allocation3], 1
    %79 = vsyncpa [#allocation4], 1

</llo_original>
